<compile_context>
chip_gen: v7x
topology: tpu7x:2x2x1
jax: 0.10.0
libtpu: 0.0.40
codegen_flags: <defaults>
</compile_context>

<pallas_src>
import math

import jax
import jax.numpy as jnp
from jax.experimental import pallas as pl
from jax.experimental.pallas import tpu as pltpu
from jax.scipy.special import ndtri  # used only by the pure-JAX reference

SQRT_2 = math.sqrt(2.0)
SQRT_PI = math.sqrt(math.pi)
PI = math.pi
MIN_ERFC_INV = 1e-6
LOG_MIN_ERFC_INV = math.log(MIN_ERFC_INV)
LOG_2_OVER_PI = math.log(2.0 / PI)


def _extreme_activation_kernel(z_ref, p_ref, out_ref):
    """Elementwise forward on a (block_rows, Dk) tile.

    p_ref rows (each (1, Dk), pre-tiled to the folded lane layout):
      0: mix[:, 0]   1: mix[:, 1]   2: mix[:, 2]
      3: -heavy      4: 1/heavy     5: light       6: -1/light
    """
    z = z_ref[...].astype(jnp.float32)            # (bR, Dk)
    m0 = p_ref[0:1, :]
    m1 = p_ref[1:2, :]
    m2 = p_ref[2:3, :]
    neg_heavy = p_ref[3:4, :]
    inv_heavy = p_ref[4:5, :]
    light = p_ref[5:6, :]
    neg_inv_light = p_ref[6:7, :]

    a = jnp.abs(z)
    # Single-select sign: both tail magnitudes are exactly 0 at z == 0, so
    # mapping z == 0 -> +1 leaves the result unchanged (up to fp noise).
    sgn = jnp.where(z < 0.0, -1.0, 1.0)

    # ---- heavy tail: (erfc(|z|/sqrt2)**(-heavy) - 1) / heavy ----------------
    # A&S 7.1.26: erfc(x) = poly(t) * exp(-x^2), t = 1/(1 + 0.3275911 x).
    # log(erfc) is formed directly in log space: log(poly(t)) - |z|^2/2.
    # TODO(synk): the exact divide for t could become pl.reciprocal(approx=True)
    # if EUP/VALU pressure warrants trading a little precision.
    x = a * (1.0 / SQRT_2)
    t = 1.0 / (1.0 + 0.3275911 * x)
    poly = t * (0.254829592
                + t * (-0.284496736
                       + t * (1.421413741
                              + t * (-1.453152027
                                     + t * 1.061405429))))
    log_g = jnp.log(poly) - 0.5 * a * a
    z_heavy = (jnp.exp(neg_heavy * log_g) - 1.0) * inv_heavy

    # ---- light tail: sqrt(2) * erfcinv((1 + light*|z|)**(-1/light)) ---------
    log_inner = jnp.log(1.0 + light * a)
    log_gg = neg_inv_light * log_inner            # log(gg) <= 0
    gg = jnp.exp(log_gg)                          # gg in (0, 1]

    # Standard branch (gg > 1e-6): erfcinv(gg) = erfinv(1 - gg) via Giles'
    # single-precision polynomial (scalar literals only, no divides).
    gg_c = jnp.maximum(gg, MIN_ERFC_INV)
    xe = 1.0 - gg_c
    w = -jnp.log(gg_c * (2.0 - gg_c))             # = -log(1 - xe^2), in [0, ~13.2]

    wc = w - 2.5
    p1 = 2.81022636e-08
    p1 = 3.43273939e-07 + p1 * wc
    p1 = -3.5233877e-06 + p1 * wc
    p1 = -4.39150654e-06 + p1 * wc
    p1 = 0.00021858087 + p1 * wc
    p1 = -0.00125372503 + p1 * wc
    p1 = -0.00417768164 + p1 * wc
    p1 = 0.246640727 + p1 * wc
    p1 = 1.50140941 + p1 * wc

    ws = jnp.sqrt(w) - 3.0
    p2 = -0.000200214257
    p2 = 0.000100950558 + p2 * ws
    p2 = 0.00134934322 + p2 * ws
    p2 = -0.00367342844 + p2 * ws
    p2 = 0.00573950773 + p2 * ws
    p2 = -0.0076224613 + p2 * ws
    p2 = 0.00943887047 + p2 * ws
    p2 = 1.00167406 + p2 * ws
    p2 = 2.83297682 + p2 * ws

    erfcinv_std = jnp.where(w < 5.0, p1, p2) * xe

    # Small-gg branch (gg <= 1e-6): series in log(gg), matching the reference.
    small_log = jnp.minimum(log_gg, LOG_MIN_ERFC_INV)
    tmp = LOG_2_OVER_PI - 2.0 * small_log
    erfcinv_small = jnp.sqrt(tmp - jnp.log(tmp)) * (1.0 / SQRT_2)

    erfcinv_val = jnp.where(gg > MIN_ERFC_INV, erfcinv_std, erfcinv_small)
    z_light = SQRT_2 * erfcinv_val

    combo = m0 * z + sgn * (m1 * z_heavy + m2 * z_light)
    out_ref[...] = combo.astype(out_ref.dtype)


def extreme_activation(z, unc_mix, unc_params, *, block_rows=None):
    """Pallas forward of ExtremeActivation. z: (B, D)."""
    B, D = z.shape

    # Lane-dense fold: (B, D) -> (B/k, k*D) with k*D a multiple of 128.
    k = 1
    if D % 128 != 0:
        fold = 128 // math.gcd(D, 128)
        if B % fold == 0:
            k = fold
    rows, dk = B // k, D * k
    zr = z.reshape(rows, dk)

    # Parameter glue (cheap, host side): hoists every per-dim divide out of the
    # hot loop and packs all per-dim params into one array / one BlockSpec.
    params = jax.nn.sigmoid(unc_params.astype(jnp.float32)) * 2.0    # (D, 2)
    heavy = params[:, 0]
    light = params[:, 1]
    mix = jax.nn.softmax(unc_mix.astype(jnp.float32), axis=1)        # (D, 3)
    packed = jnp.stack(
        [mix[:, 0], mix[:, 1], mix[:, 2],
         -heavy, 1.0 / heavy, light, -1.0 / light],
        axis=0)                                                      # (7, D)
    packed = jnp.tile(packed, (1, k))                                # (7, k*D)

    # Tiling: ~2 MiB z tiles, rows a multiple of 8 (or the full array).
    if block_rows is None:
        block_rows = max(8, (1 << 21) // (dk * 4))
    if block_rows >= rows:
        block_rows = rows                      # single full-array block
    else:
        block_rows = max(8, (block_rows // 8) * 8)
    grid = (pl.cdiv(rows, block_rows),)

    out = pl.pallas_call(
        _extreme_activation_kernel,
        out_shape=jax.ShapeDtypeStruct((rows, dk), z.dtype),
        grid_spec=pltpu.PrefetchScalarGridSpec(
            num_scalar_prefetch=0,
            grid=grid,
            in_specs=[
                pl.BlockSpec((block_rows, dk), lambda i: (i, 0)),    # z tile
                pl.BlockSpec((7, dk), lambda i: (0, 0)),             # packed params
            ],
            out_specs=pl.BlockSpec((block_rows, dk), lambda i: (i, 0)),
        ),
        compiler_params=pltpu.CompilerParams(
            dimension_semantics=("parallel",)),
    )(zr, packed)
    return out.reshape(B, D)


def extreme_activation_reference(z, unc_mix, unc_params):
    """Pure-JAX reference mirroring the PyTorch forward exactly."""
    params = jax.nn.sigmoid(unc_params) * 2.0
    heavy = params[:, 0]
    light = params[:, 1]
    mix = jax.nn.softmax(unc_mix, axis=1)

    a = jnp.abs(z)
    sgn = jnp.sign(z)

    g = jax.scipy.special.erfc(a / SQRT_2)
    z_heavy = (jnp.power(g, -heavy) - 1.0) / heavy * sgn

    inner = 1.0 + light * a
    gg = jnp.power(inner, -1.0 / light)
    log_gg = -jnp.log(inner) / light
    standard_x = jnp.maximum(gg, MIN_ERFC_INV)
    small_log_x = jnp.minimum(log_gg, LOG_MIN_ERFC_INV)
    erfcinv_std = -ndtri(0.5 * standard_x) / SQRT_2
    tmp = LOG_2_OVER_PI - 2.0 * small_log_x
    erfcinv_small = jnp.sqrt(tmp - jnp.log(tmp)) / SQRT_2
    erfcinv_val = jnp.where(gg > MIN_ERFC_INV, erfcinv_std, erfcinv_small)
    z_light = SQRT_2 * erfcinv_val * sgn

    return mix[:, 0] * z + mix[:, 1] * z_heavy + mix[:, 2] * z_light


if __name__ == "__main__":
    B, D = 8, 32   # batch, feature dim (module's `dim`); folds to (2, 128)

    key = jax.random.PRNGKey(0)
    kz, km, kp = jax.random.split(key, 3)

    # Module __init__ uses ones([dim,3]) / ones([dim,2]); perturb slightly so
    # per-dim parameters differ.
    unc_mix = jnp.ones((D, 3), jnp.float32) + 0.1 * jax.random.normal(km, (D, 3), jnp.float32)
    unc_params = jnp.ones((D, 2), jnp.float32) + 0.1 * jax.random.normal(kp, (D, 2), jnp.float32)

    z = jax.random.normal(kz, (B, D), jnp.float32)

    out = jax.block_until_ready(extreme_activation(z, unc_mix, unc_params))
    ref = jax.block_until_ready(extreme_activation_reference(z, unc_mix, unc_params))

    # Tolerance accounts for the in-kernel A&S log-erfc and Giles erfinv
    # approximations (both ~1e-4 relative or better on N(0,1) inputs).
    if not jnp.allclose(out, ref, rtol=5e-2, atol=1e-3):
        max_err = jnp.max(jnp.abs(out - ref))
        raise AssertionError(f"Pallas output mismatch, max abs err = {max_err}")

    print("KERNEL_OK")
</pallas_src>

<mosaic_0001>
module attributes {stable_mosaic.version = 11 : i64} {
  func.func @_extreme_activation_kernel(%arg0: i32, %arg1: memref<2x128xf32, #tpu.memory_space<vmem>>, %arg2: memref<7x128xf32, #tpu.memory_space<vmem>>, %arg3: memref<2x128xf32, #tpu.memory_space<vmem>>) attributes {dimension_semantics = [#tpu.dimension_semantics<parallel>], iteration_bounds = array<i64: 1>, scalar_prefetch = 0 : i64, scratch_operands = 0 : i64, tpu.core_type = #tpu.core_type<tc>, window_params = [{transform_indices = @transform_0, window_bounds = array<i64: 2, 128>}, {pipeline_mode = #tpu.pipeline_mode<synchronous>, transform_indices = @transform_1, window_bounds = array<i64: 7, 128>}, {transform_indices = @transform_2, window_bounds = array<i64: 2, 128>}]} {
    %c0 = arith.constant 0 : index
    %c0_0 = arith.constant 0 : index
    %0 = vector.load %arg1[%c0, %c0_0] : memref<2x128xf32, #tpu.memory_space<vmem>>, vector<2x128xf32>
    %c0_1 = arith.constant 0 : index
    %c0_2 = arith.constant 0 : index
    %1 = vector.load %arg2[%c0_1, %c0_2] : memref<7x128xf32, #tpu.memory_space<vmem>>, vector<1x128xf32>
    %c1 = arith.constant 1 : index
    %c0_3 = arith.constant 0 : index
    %2 = vector.load %arg2[%c1, %c0_3] : memref<7x128xf32, #tpu.memory_space<vmem>>, vector<1x128xf32>
    %c2 = arith.constant 2 : index
    %c0_4 = arith.constant 0 : index
    %3 = vector.load %arg2[%c2, %c0_4] : memref<7x128xf32, #tpu.memory_space<vmem>>, vector<1x128xf32>
    %c3 = arith.constant 3 : index
    %c0_5 = arith.constant 0 : index
    %4 = vector.load %arg2[%c3, %c0_5] : memref<7x128xf32, #tpu.memory_space<vmem>>, vector<1x128xf32>
    %c4 = arith.constant 4 : index
    %c0_6 = arith.constant 0 : index
    %5 = vector.load %arg2[%c4, %c0_6] : memref<7x128xf32, #tpu.memory_space<vmem>>, vector<1x128xf32>
    %c5 = arith.constant 5 : index
    %c0_7 = arith.constant 0 : index
    %6 = vector.load %arg2[%c5, %c0_7] : memref<7x128xf32, #tpu.memory_space<vmem>>, vector<1x128xf32>
    %c6 = arith.constant 6 : index
    %c0_8 = arith.constant 0 : index
    %7 = vector.load %arg2[%c6, %c0_8] : memref<7x128xf32, #tpu.memory_space<vmem>>, vector<1x128xf32>
    %8 = math.absf %0 : vector<2x128xf32>
    %cst = arith.constant 0.000000e+00 : f32
    %9 = vector.broadcast %cst : f32 to vector<2x128xf32>
    %10 = arith.cmpf olt, %0, %9 : vector<2x128xf32>
    %cst_9 = arith.constant -1.000000e+00 : f32
    %cst_10 = arith.constant 1.000000e+00 : f32
    %11 = vector.broadcast %cst_9 : f32 to vector<2x128xf32>
    %12 = vector.broadcast %cst_10 : f32 to vector<2x128xf32>
    %13 = arith.select %10, %11, %12 : vector<2x128xi1>, vector<2x128xf32>
    %cst_11 = arith.constant 0.707106769 : f32
    %14 = vector.broadcast %cst_11 : f32 to vector<2x128xf32>
    %15 = arith.mulf %8, %14 : vector<2x128xf32>
    %cst_12 = arith.constant 0.327591091 : f32
    %16 = vector.broadcast %cst_12 : f32 to vector<2x128xf32>
    %17 = arith.mulf %16, %15 : vector<2x128xf32>
    %cst_13 = arith.constant 1.000000e+00 : f32
    %18 = vector.broadcast %cst_13 : f32 to vector<2x128xf32>
    %19 = arith.addf %18, %17 : vector<2x128xf32>
    %cst_14 = arith.constant 1.000000e+00 : f32
    %20 = vector.broadcast %cst_14 : f32 to vector<2x128xf32>
    %21 = arith.divf %20, %19 : vector<2x128xf32>
    %cst_15 = arith.constant 1.06140542 : f32
    %22 = vector.broadcast %cst_15 : f32 to vector<2x128xf32>
    %23 = arith.mulf %21, %22 : vector<2x128xf32>
    %cst_16 = arith.constant -1.45315206 : f32
    %24 = vector.broadcast %cst_16 : f32 to vector<2x128xf32>
    %25 = arith.addf %24, %23 : vector<2x128xf32>
    %26 = arith.mulf %21, %25 : vector<2x128xf32>
    %cst_17 = arith.constant 1.42141378 : f32
    %27 = vector.broadcast %cst_17 : f32 to vector<2x128xf32>
    %28 = arith.addf %27, %26 : vector<2x128xf32>
    %29 = arith.mulf %21, %28 : vector<2x128xf32>
    %cst_18 = arith.constant -0.284496725 : f32
    %30 = vector.broadcast %cst_18 : f32 to vector<2x128xf32>
    %31 = arith.addf %30, %29 : vector<2x128xf32>
    %32 = arith.mulf %21, %31 : vector<2x128xf32>
    %cst_19 = arith.constant 0.254829586 : f32
    %33 = vector.broadcast %cst_19 : f32 to vector<2x128xf32>
    %34 = arith.addf %33, %32 : vector<2x128xf32>
    %35 = arith.mulf %21, %34 : vector<2x128xf32>
    %36 = math.log %35 : vector<2x128xf32>
    %cst_20 = arith.constant 5.000000e-01 : f32
    %37 = vector.broadcast %cst_20 : f32 to vector<2x128xf32>
    %38 = arith.mulf %37, %8 : vector<2x128xf32>
    %39 = arith.mulf %38, %8 : vector<2x128xf32>
    %40 = arith.subf %36, %39 : vector<2x128xf32>
    %41 = vector.broadcast %4 : vector<1x128xf32> to vector<2x128xf32>
    %42 = arith.mulf %41, %40 : vector<2x128xf32>
    %43 = math.exp %42 : vector<2x128xf32>
    %cst_21 = arith.constant 1.000000e+00 : f32
    %44 = vector.broadcast %cst_21 : f32 to vector<2x128xf32>
    %45 = arith.subf %43, %44 : vector<2x128xf32>
    %46 = vector.broadcast %5 : vector<1x128xf32> to vector<2x128xf32>
    %47 = arith.mulf %45, %46 : vector<2x128xf32>
    %48 = vector.broadcast %6 : vector<1x128xf32> to vector<2x128xf32>
    %49 = arith.mulf %48, %8 : vector<2x128xf32>
    %cst_22 = arith.constant 1.000000e+00 : f32
    %50 = vector.broadcast %cst_22 : f32 to vector<2x128xf32>
    %51 = arith.addf %50, %49 : vector<2x128xf32>
    %52 = math.log %51 : vector<2x128xf32>
    %53 = vector.broadcast %7 : vector<1x128xf32> to vector<2x128xf32>
    %54 = arith.mulf %53, %52 : vector<2x128xf32>
    %55 = math.exp %54 : vector<2x128xf32>
    %cst_23 = arith.constant 9.99999997E-7 : f32
    %56 = vector.broadcast %cst_23 : f32 to vector<2x128xf32>
    %57 = arith.maximumf %55, %56 : vector<2x128xf32>
    %cst_24 = arith.constant 1.000000e+00 : f32
    %58 = vector.broadcast %cst_24 : f32 to vector<2x128xf32>
    %59 = arith.subf %58, %57 : vector<2x128xf32>
    %cst_25 = arith.constant 2.000000e+00 : f32
    %60 = vector.broadcast %cst_25 : f32 to vector<2x128xf32>
    %61 = arith.subf %60, %57 : vector<2x128xf32>
    %62 = arith.mulf %57, %61 : vector<2x128xf32>
    %63 = math.log %62 : vector<2x128xf32>
    %cst_26 = arith.constant 0.000000e+00 : f32
    %64 = vector.broadcast %cst_26 : f32 to vector<2x128xf32>
    %65 = arith.subf %64, %63 : vector<2x128xf32>
    %cst_27 = arith.constant 2.500000e+00 : f32
    %66 = vector.broadcast %cst_27 : f32 to vector<2x128xf32>
    %67 = arith.subf %65, %66 : vector<2x128xf32>
    %cst_28 = arith.constant 2.81022636E-8 : f32
    %68 = vector.broadcast %cst_28 : f32 to vector<2x128xf32>
    %69 = arith.mulf %68, %67 : vector<2x128xf32>
    %cst_29 = arith.constant 3.43273939E-7 : f32
    %70 = vector.broadcast %cst_29 : f32 to vector<2x128xf32>
    %71 = arith.addf %70, %69 : vector<2x128xf32>
    %72 = arith.mulf %71, %67 : vector<2x128xf32>
    %cst_30 = arith.constant -3.5233877E-6 : f32
    %73 = vector.broadcast %cst_30 : f32 to vector<2x128xf32>
    %74 = arith.addf %73, %72 : vector<2x128xf32>
    %75 = arith.mulf %74, %67 : vector<2x128xf32>
    %cst_31 = arith.constant -4.39150654E-6 : f32
    %76 = vector.broadcast %cst_31 : f32 to vector<2x128xf32>
    %77 = arith.addf %76, %75 : vector<2x128xf32>
    %78 = arith.mulf %77, %67 : vector<2x128xf32>
    %cst_32 = arith.constant 2.1858087E-4 : f32
    %79 = vector.broadcast %cst_32 : f32 to vector<2x128xf32>
    %80 = arith.addf %79, %78 : vector<2x128xf32>
    %81 = arith.mulf %80, %67 : vector<2x128xf32>
    %cst_33 = arith.constant -0.00125372503 : f32
    %82 = vector.broadcast %cst_33 : f32 to vector<2x128xf32>
    %83 = arith.addf %82, %81 : vector<2x128xf32>
    %84 = arith.mulf %83, %67 : vector<2x128xf32>
    %cst_34 = arith.constant -0.00417768164 : f32
    %85 = vector.broadcast %cst_34 : f32 to vector<2x128xf32>
    %86 = arith.addf %85, %84 : vector<2x128xf32>
    %87 = arith.mulf %86, %67 : vector<2x128xf32>
    %cst_35 = arith.constant 0.246640727 : f32
    %88 = vector.broadcast %cst_35 : f32 to vector<2x128xf32>
    %89 = arith.addf %88, %87 : vector<2x128xf32>
    %90 = arith.mulf %89, %67 : vector<2x128xf32>
    %cst_36 = arith.constant 1.50140941 : f32
    %91 = vector.broadcast %cst_36 : f32 to vector<2x128xf32>
    %92 = arith.addf %91, %90 : vector<2x128xf32>
    %93 = math.sqrt %65 : vector<2x128xf32>
    %cst_37 = arith.constant 3.000000e+00 : f32
    %94 = vector.broadcast %cst_37 : f32 to vector<2x128xf32>
    %95 = arith.subf %93, %94 : vector<2x128xf32>
    %cst_38 = arith.constant -2.00214257E-4 : f32
    %96 = vector.broadcast %cst_38 : f32 to vector<2x128xf32>
    %97 = arith.mulf %96, %95 : vector<2x128xf32>
    %cst_39 = arith.constant 1.00950558E-4 : f32
    %98 = vector.broadcast %cst_39 : f32 to vector<2x128xf32>
    %99 = arith.addf %98, %97 : vector<2x128xf32>
    %100 = arith.mulf %99, %95 : vector<2x128xf32>
    %cst_40 = arith.constant 0.00134934322 : f32
    %101 = vector.broadcast %cst_40 : f32 to vector<2x128xf32>
    %102 = arith.addf %101, %100 : vector<2x128xf32>
    %103 = arith.mulf %102, %95 : vector<2x128xf32>
    %cst_41 = arith.constant -0.00367342844 : f32
    %104 = vector.broadcast %cst_41 : f32 to vector<2x128xf32>
    %105 = arith.addf %104, %103 : vector<2x128xf32>
    %106 = arith.mulf %105, %95 : vector<2x128xf32>
    %cst_42 = arith.constant 0.00573950773 : f32
    %107 = vector.broadcast %cst_42 : f32 to vector<2x128xf32>
    %108 = arith.addf %107, %106 : vector<2x128xf32>
    %109 = arith.mulf %108, %95 : vector<2x128xf32>
    %cst_43 = arith.constant -0.0076224613 : f32
    %110 = vector.broadcast %cst_43 : f32 to vector<2x128xf32>
    %111 = arith.addf %110, %109 : vector<2x128xf32>
    %112 = arith.mulf %111, %95 : vector<2x128xf32>
    %cst_44 = arith.constant 0.00943887047 : f32
    %113 = vector.broadcast %cst_44 : f32 to vector<2x128xf32>
    %114 = arith.addf %113, %112 : vector<2x128xf32>
    %115 = arith.mulf %114, %95 : vector<2x128xf32>
    %cst_45 = arith.constant 1.00167406 : f32
    %116 = vector.broadcast %cst_45 : f32 to vector<2x128xf32>
    %117 = arith.addf %116, %115 : vector<2x128xf32>
    %118 = arith.mulf %117, %95 : vector<2x128xf32>
    %cst_46 = arith.constant 2.83297682 : f32
    %119 = vector.broadcast %cst_46 : f32 to vector<2x128xf32>
    %120 = arith.addf %119, %118 : vector<2x128xf32>
    %cst_47 = arith.constant 5.000000e+00 : f32
    %121 = vector.broadcast %cst_47 : f32 to vector<2x128xf32>
    %122 = arith.cmpf olt, %65, %121 : vector<2x128xf32>
    %123 = arith.select %122, %92, %120 : vector<2x128xi1>, vector<2x128xf32>
    %124 = arith.mulf %123, %59 : vector<2x128xf32>
    %cst_48 = arith.constant -13.8155107 : f32
    %125 = vector.broadcast %cst_48 : f32 to vector<2x128xf32>
    %126 = arith.minimumf %54, %125 : vector<2x128xf32>
    %cst_49 = arith.constant 2.000000e+00 : f32
    %127 = vector.broadcast %cst_49 : f32 to vector<2x128xf32>
    %128 = arith.mulf %127, %126 : vector<2x128xf32>
    %cst_50 = arith.constant -0.4515827 : f32
    %129 = vector.broadcast %cst_50 : f32 to vector<2x128xf32>
    %130 = arith.subf %129, %128 : vector<2x128xf32>
    %131 = math.log %130 : vector<2x128xf32>
    %132 = arith.subf %130, %131 : vector<2x128xf32>
    %133 = math.sqrt %132 : vector<2x128xf32>
    %cst_51 = arith.constant 0.707106769 : f32
    %134 = vector.broadcast %cst_51 : f32 to vector<2x128xf32>
    %135 = arith.mulf %133, %134 : vector<2x128xf32>
    %cst_52 = arith.constant 9.99999997E-7 : f32
    %136 = vector.broadcast %cst_52 : f32 to vector<2x128xf32>
    %137 = arith.cmpf ogt, %55, %136 : vector<2x128xf32>
    %138 = arith.select %137, %124, %135 : vector<2x128xi1>, vector<2x128xf32>
    %cst_53 = arith.constant 1.41421354 : f32
    %139 = vector.broadcast %cst_53 : f32 to vector<2x128xf32>
    %140 = arith.mulf %139, %138 : vector<2x128xf32>
    %141 = vector.broadcast %1 : vector<1x128xf32> to vector<2x128xf32>
    %142 = arith.mulf %141, %0 : vector<2x128xf32>
    %143 = vector.broadcast %2 : vector<1x128xf32> to vector<2x128xf32>
    %144 = arith.mulf %143, %47 : vector<2x128xf32>
    %145 = vector.broadcast %3 : vector<1x128xf32> to vector<2x128xf32>
    %146 = arith.mulf %145, %140 : vector<2x128xf32>
    %147 = arith.addf %144, %146 : vector<2x128xf32>
    %148 = arith.mulf %13, %147 : vector<2x128xf32>
    %149 = arith.addf %142, %148 : vector<2x128xf32>
    %c0_54 = arith.constant 0 : index
    %c0_55 = arith.constant 0 : index
    %150 = vector.load %arg3[%c0_54, %c0_55] : memref<2x128xf32, #tpu.memory_space<vmem>>, vector<2x128xf32>
    tpu.vector_store %arg3[%c0_54, %c0_55], %149 {strides = array<i32>} : memref<2x128xf32, #tpu.memory_space<vmem>>, vector<2x128xf32>,
    return
  }
  func.func @transform_0(%arg0: i32) -> (i32, i32) {
    %c0_i32 = arith.constant 0 : i32
    %c0_i32_0 = arith.constant 0 : i32
    return %arg0, %c0_i32 : i32, i32
  }
  func.func @transform_1(%arg0: i32) -> (i32, i32) {
    %c0_i32 = arith.constant 0 : i32
    %c0_i32_0 = arith.constant 0 : i32
    %c0_i32_1 = arith.constant 0 : i32
    return %c0_i32, %c0_i32_0 : i32, i32
  }
  func.func @transform_2(%arg0: i32) -> (i32, i32) {
    %c0_i32 = arith.constant 0 : i32
    %c0_i32_0 = arith.constant 0 : i32
    return %arg0, %c0_i32 : i32, i32
  }
}

</mosaic_0001>

<llo_original>
// kernel: tpu_custom_call.1
$region0: #{tpu_custom_call.1}
  #allocation0 [shape = 'u32[]', space=smem, size = 0x4, offset = 0x4, fixed_abs, tag = 'smem constant byte address 0x4 - core index']
  #allocation1 [shape = 'u32[144,128]{1,0:T(1,128)}', space=vmem, size = 0x12000, scoped, tag = 'internal scratch']
  %s0 = inlined_call_operand.hbm [shape: f32[2,128], index: 0, kind: input, shape index: {}]
  %s1 = inlined_call_operand.hbm [shape: f32[7,128], index: 1, kind: input, shape index: {}]
  %s2 = inlined_call_operand.hbm [shape: f32[2,128], index: 2, kind: output, shape index: {}]
  %s3 = sld [smem:[#allocation0]]
  $region26: #{tpu_custom_call.1} parent=0
    _
  %s5 = ssub.s32 1, %s3
  %s6 = scalar_select 0, %s5, %s3
  $region1: #{tpu_custom_call.1} parent=0
    #allocation2 [shape = 'u8[1024]{0}', space=vmem, size = 0x400, scoped, tag = 'input window, operand 0, single buffered']
    #allocation3 [shape = 's32[1]{0}', space=sflag, size = 0x4, scoped, tag = 'scoped memory for tpu_custom_call.1']
    #allocation4 [shape = 's32[1]{0}', space=sflag, size = 0x4, scoped, tag = 'scoped memory for tpu_custom_call.1']
    #allocation5 [shape = 'u8[4096]{0}', space=vmem, size = 0x1000, scoped, tag = 'input window, operand 1, single buffered']
    #allocation6 [shape = 's32[1]{0}', space=sflag, size = 0x4, scoped, tag = 'scoped memory for tpu_custom_call.1']
    #allocation7 [shape = 'u8[1024]{0}', space=vmem, size = 0x400, scoped, tag = 'output window, operand 0, single buffered']
    %7 = vsyncpa [#allocation3], 0
    %8 = vsyncpa [#allocation6], 0
    %9 = vsyncpa [#allocation4], 0
    // Predicated region
    $region2: #{tpu_custom_call.1} parent=1 // pred_check
      _
    $region3: #{tpu_custom_call.1} parent=1 // pred_check_branch
      %11 = sbr.rel (0) target = $region5
    $region4: #{tpu_custom_call.1} parent=1 // pred_region
      %s13 = ssub.s32 32, 32
      %14 = vsyncadd [#allocation3], %s13
      %s16 = sshll.u32 [#allocation2], 4
      %s17 = int_to_ptr.vmem [resolvable:$true] %s16
      %19 = dma.hbm_to_vmem [thread:$0]  %s0, 32, %s17, [#allocation3]
    $region5: #{tpu_custom_call.1} parent=1 // pred_fallthru
      _
    // Predicated region
    $region6: #{tpu_custom_call.1} parent=1 // pred_check
      _
    $region7: #{tpu_custom_call.1} parent=1 // pred_check_branch
      %21 = sbr.rel (0) target = $region9
    $region8: #{tpu_custom_call.1} parent=1 // pred_region
      %s23 = ssub.s32 128, 128
      %24 = vsyncadd [#allocation6], %s23
      %s26 = sshll.u32 [#allocation5], 4
      %s27 = int_to_ptr.vmem [resolvable:$true] %s26
      %29 = dma.hbm_to_vmem [thread:$0]  %s1, 128, %s27, [#allocation6]
    $region9: #{tpu_custom_call.1} parent=1 // pred_fallthru
      _
    // Predicated region
    $region10: #{tpu_custom_call.1} parent=1 // pred_check
      _
    $region11: #{tpu_custom_call.1} parent=1 // pred_check_branch
      %31 = sbr.rel (0) target = $region13
    $region12: #{tpu_custom_call.1} parent=1 // pred_region
      %32 = dma.done [#allocation3], 32
    $region13: #{tpu_custom_call.1} parent=1 // pred_fallthru
      _
    // Predicated region
    $region14: #{tpu_custom_call.1} parent=1 // pred_check
      _
    $region15: #{tpu_custom_call.1} parent=1 // pred_check_branch
      %34 = sbr.rel (0) target = $region17
    $region16: #{tpu_custom_call.1} parent=1 // pred_region
      %35 = dma.done [#allocation6], 128
    $region17: #{tpu_custom_call.1} parent=1 // pred_fallthru
      _
    %v36 = vld [vmem:[#allocation2] sm:$0x3]
    %v37 = vld [vmem:[#allocation5] sm:$0x1]
    %v38 = vld [vmem:[#allocation5 + $0x1] sm:$0x1]
    %v39 = vld [vmem:[#allocation5 + $0x2] sm:$0x1]
    %v40 = vld [vmem:[#allocation5 + $0x3] sm:$0x1]
    %v41 = vld [vmem:[#allocation5 + $0x4] sm:$0x1]
    %v42 = vld [vmem:[#allocation5 + $0x5] sm:$0x1]
    %v43 = vld [vmem:[#allocation5 + $0x6] sm:$0x1]
    %v44 = vand.u32 2147483647, %v36
    %vm45 = vcmp.lt.f32.partialorder %v36, 0.0
    %v46 = vsel %vm45, -1.0, 1.0
    %v47 = vmul.f32 %v44, 0.70710677
    %v48 = vmul.f32 %v47, 0.3275911
    %v49 = vadd.f32 %v48, 1.0
    %v50 = vrcp.pop %v49
    %v51 = vmul.f32 1.0, %v50
    %v52 = vmul.f32 %v51, 1.0614054
    %v53 = vadd.f32 %v52, -1.4531521
    %v54 = vmul.f32 %v51, %v53
    %v55 = vadd.f32 %v54, 1.4214138
    %v56 = vmul.f32 %v51, %v55
    %v57 = vadd.f32 %v56, -0.28449672
    %v58 = vmul.f32 %v51, %v57
    %v59 = vadd.f32 %v58, 0.2548296
    %v60 = vmul.f32 %v51, %v59
    %v61 = vlog2.pop %v60
    %v62 = vmul.f32 %v61, 0.6931472
    %v63 = vmul.f32 %v44, 0.5
    %v64 = vmul.f32 %v63, %v44
    %v65 = vsub.f32 %v62, %v64
    %v66 = vlaneseq
    %v67 = vshrl.u32 %v66, 7
    %v68 = vsub.s32 0, %v67
    %v69 = vrot.slane %v40, %v68
    %v70 = vmul.f32 %v69, %v65
    %v71 = vmul.f32 %v70, 1.442695
    %v72 = vpow.pop %v71
    %v73 = vsub.f32 %v72, 1.0
    %v74 = vlaneseq
    %v75 = vshrl.u32 %v74, 7
    %v76 = vsub.s32 0, %v75
    %v77 = vrot.slane %v41, %v76
    %v78 = vmul.f32 %v73, %v77
    %v79 = vlaneseq
    %v80 = vshrl.u32 %v79, 7
    %v81 = vsub.s32 0, %v80
    %v82 = vrot.slane %v42, %v81
    %v83 = vmul.f32 %v82, %v44
    %v84 = vadd.f32 %v83, 1.0
    %v85 = vlog2.pop %v84
    %v86 = vmul.f32 %v85, 0.6931472
    %v87 = vlaneseq
    %v88 = vshrl.u32 %v87, 7
    %v89 = vsub.s32 0, %v88
    %v90 = vrot.slane %v43, %v89
    %v91 = vmul.f32 %v90, %v86
    %v92 = vmul.f32 %v91, 1.442695
    %v93 = vpow.pop %v92
    %v94 = vmax.f32 %v93, 1e-06
    %v95 = vsub.f32 1.0, %v94
    %v96 = vsub.f32 2.0, %v94
    %v97 = vmul.f32 %v94, %v96
    %v98 = vlog2.pop %v97
    %v99 = vmul.f32 %v98, 0.6931472
    %v100 = vsub.f32 0.0, %v99
    %v101 = vsub.f32 %v100, 2.5
    %v102 = vmul.f32 %v101, 2.8102264e-08
    %v103 = vadd.f32 %v102, 3.4327394e-07
    %v104 = vmul.f32 %v103, %v101
    %v105 = vadd.f32 %v104, -3.5233877e-06
    %v106 = vmul.f32 %v105, %v101
    %v107 = vadd.f32 %v106, -4.3915065e-06
    %v108 = vmul.f32 %v107, %v101
    %v109 = vadd.f32 %v108, 0.00021858087
    %v110 = vmul.f32 %v109, %v101
    %v111 = vadd.f32 %v110, -0.001253725
    %v112 = vmul.f32 %v111, %v101
    %v113 = vadd.f32 %v112, -0.0041776816
    %v114 = vmul.f32 %v113, %v101
    %v115 = vadd.f32 %v114, 0.24664073
    %v116 = vmul.f32 %v115, %v101
    %v117 = vadd.f32 %v116, 1.5014094
    %v118 = vrsqrt.pop %v100
    %v119 = vmul.f32 %v100, %v118
    %vm120 = vcmp.eq.f32.partialorder %v100, inf
    %v121 = vsel %vm120, %v100, %v119
    %vm122 = vcmp.eq.f32.partialorder %v100, 0.0
    %v123 = vand.u32 %v100, 2147483648
    %v124 = vsel %vm122, %v123, %v121
    %v125 = vsub.f32 %v124, 3.0
    %v126 = vmul.f32 %v125, -0.00020021426
    %v127 = vadd.f32 %v126, 0.00010095056
    %v128 = vmul.f32 %v127, %v125
    %v129 = vadd.f32 %v128, 0.0013493432
    %v130 = vmul.f32 %v129, %v125
    %v131 = vadd.f32 %v130, -0.0036734284
    %v132 = vmul.f32 %v131, %v125
    %v133 = vadd.f32 %v132, 0.0057395077
    %v134 = vmul.f32 %v133, %v125
    %v135 = vadd.f32 %v134, -0.0076224613
    %v136 = vmul.f32 %v135, %v125
    %v137 = vadd.f32 %v136, 0.0094388705
    %v138 = vmul.f32 %v137, %v125
    %v139 = vadd.f32 %v138, 1.001674
    %v140 = vmul.f32 %v139, %v125
    %v141 = vadd.f32 %v140, 2.8329768
    %vm142 = vcmp.lt.f32.partialorder %v100, 5.0
    %v143 = vsel %vm142, %v117, %v141
    %v144 = vmul.f32 %v143, %v95
    %v145 = vmin.f32 %v91, -13.815511
    %v146 = vmul.f32 %v145, 2.0
    %v147 = vsub.f32 -0.4515827, %v146
    %v148 = vlog2.pop %v147
    %v149 = vmul.f32 %v148, 0.6931472
    %v150 = vsub.f32 %v147, %v149
    %v151 = vrsqrt.pop %v150
    %v152 = vmul.f32 %v150, %v151
    %vm153 = vcmp.eq.f32.partialorder %v150, inf
    %v154 = vsel %vm153, %v150, %v152
    %vm155 = vcmp.eq.f32.partialorder %v150, 0.0
    %v156 = vand.u32 %v150, 2147483648
    %v157 = vsel %vm155, %v156, %v154
    %v158 = vmul.f32 %v157, 0.70710677
    %vm159 = vcmp.gt.f32.partialorder %v93, 1e-06
    %v160 = vsel %vm159, %v144, %v158
    %v161 = vmul.f32 %v160, 1.4142135
    %v162 = vlaneseq
    %v163 = vshrl.u32 %v162, 7
    %v164 = vsub.s32 0, %v163
    %v165 = vrot.slane %v37, %v164
    %v166 = vmul.f32 %v165, %v36
    %v167 = vlaneseq
    %v168 = vshrl.u32 %v167, 7
    %v169 = vsub.s32 0, %v168
    %v170 = vrot.slane %v38, %v169
    %v171 = vmul.f32 %v170, %v78
    %v172 = vlaneseq
    %v173 = vshrl.u32 %v172, 7
    %v174 = vsub.s32 0, %v173
    %v175 = vrot.slane %v39, %v174
    %v176 = vmul.f32 %v175, %v161
    %v177 = vadd.f32 %v171, %v176
    %v178 = vmul.f32 %v46, %v177
    %v179 = vadd.f32 %v166, %v178
    %180 = vst [vmem:[#allocation7] sm:$0x3] %v179
    // Predicated region
    $region18: #{tpu_custom_call.1} parent=1 // pred_check
      _
    $region19: #{tpu_custom_call.1} parent=1 // pred_check_branch
      %182 = sbr.rel (0) target = $region21
    $region20: #{tpu_custom_call.1} parent=1 // pred_region
      %s184 = ssub.s32 32, 32
      %185 = vsyncadd [#allocation4], %s184
      %s187 = sshll.u32 [#allocation7], 4
      %s188 = int_to_ptr.vmem [resolvable:$true] %s187
      %190 = dma.vmem_to_hbm [thread:$0]  %s188, 32, %s2, [#allocation4]
    $region21: #{tpu_custom_call.1} parent=1 // pred_fallthru
      _
    // Predicated region
    $region22: #{tpu_custom_call.1} parent=1 // pred_check
      _
    $region23: #{tpu_custom_call.1} parent=1 // pred_check_branch
      %192 = sbr.rel (0) target = $region25
    $region24: #{tpu_custom_call.1} parent=1 // pred_region
      %193 = dma.done [#allocation4], 32
    $region25: #{tpu_custom_call.1} parent=1 // pred_fallthru
      _
    %194 = vsyncpa [#allocation3], 1
    %195 = vsyncpa [#allocation6], 1
    %196 = vsyncpa [#allocation4], 1

</llo_original>
